<compile_context>
chip_gen: v7x
topology: tpu7x:2x2x1
jax: 0.10.0
libtpu: 0.0.40
codegen_flags: <defaults>
</compile_context>

<pallas_src>
import jax
import jax.numpy as jnp
from jax.experimental import pallas as pl
from jax.experimental.pallas import tpu as pltpu

# ---- model dimensions (small, consistent with the module's forward) ----
B = 2        # batch
C_IN = 4     # input channels (features per timestep)
L = 10       # sequence length
H1 = 32      # encoder conv1 out channels
H2 = 64      # encoder conv2 out channels
HF = 32      # decoder hidden
A = 3        # decoder outputs (e.g. action count)
K = 3        # conv kernel size

L1 = L - (K - 1)       # 8  after conv1 (valid)
P1 = L1 // 2           # 4  after maxpool1
L2 = P1 - (K - 1)      # 2  after conv2
P2 = L2 // 2           # 1  after maxpool2  -> squeeze() gives (B, H2)

ROWS = B * P1          # 8  working rows after pool1 (one vreg of sublanes)
KC1 = K * C_IN + 1     # 13 conv1 im2col width (+1 ones column for the bias)
KC1_PAD = 16           # sublane-tile aligned conv1 contraction width
A_PAD = 128            # lane-padded output width (unmasked vector stores)

assert L1 % 2 == 0 and L2 == 2 and P2 == 1 and ROWS == 8

# ---- packed weight-slab row layout ((SLAB_ROWS, 128) f32, 8-row aligned) ----
R_W1 = 0                       # (KC1_PAD, H1): conv1 taps + bias row + zero pad
R_W2 = R_W1 + KC1_PAD          # (K*H1, H2): conv2 taps, tap k at rows k*H1
R_B2 = R_W2 + K * H1           # (1, H2): conv2 bias
R_WF1 = R_B2 + 8               # (H2, HF): fc1 weight^T
R_BF1 = R_WF1 + H2             # (1, HF): fc1 bias
R_WF2 = R_BF1 + 8              # (HF, A_PAD): fc2 weight^T, lane-padded
R_BF2 = R_WF2 + HF             # (1, A_PAD): fc2 bias, lane-padded
SLAB_ROWS = R_BF2 + 8          # 232


def seq2seq_kernel(x1_ref, w_ref, out_ref):
    # ---------- conv1: ONE matmul over the whole batch (bias via ones col) ----
    # x1_ref: (2*ROWS, KC1_PAD), rows = [even pooled positions | odd positions]
    w1 = w_ref[R_W1:R_W1 + KC1_PAD, 0:H1]
    y1 = jnp.maximum(
        jnp.dot(x1_ref[...], w1, preferred_element_type=jnp.float32), 0.0)

    # ---------- MaxPool1d(2): max of the two contiguous halves ----------
    p1 = jnp.maximum(y1[:ROWS, :], y1[ROWS:, :])           # (ROWS, H1), row = b*P1 + p

    # ---------- conv2: K accumulating matmuls over sublane-rolled p1 ----------
    z = jnp.dot(p1, w_ref[R_W2:R_W2 + H1, 0:H2],
                preferred_element_type=jnp.float32)        # tap k = 0
    for k in range(1, K):
        p1_k = pltpu.roll(p1, ROWS - k, 0)                 # row r -> p1[(r + k) % ROWS]
        z = z + jnp.dot(p1_k, w_ref[R_W2 + k * H1:R_W2 + (k + 1) * H1, 0:H2],
                        preferred_element_type=jnp.float32)
    y2 = jnp.maximum(z + w_ref[R_B2:R_B2 + 1, 0:H2], 0.0)  # (ROWS, H2); rows with
    #                                                      # l >= L2 are unused garbage

    # ---------- MaxPool1d(2) -> context; valid context rows sit at r = b*P1 ----
    c = jnp.maximum(y2, pltpu.roll(y2, ROWS - 1, 0))       # (ROWS, H2)

    # ---------- decoder MLP over all ROWS rows (extra rows are MXU-free) -------
    h = jnp.maximum(
        jnp.dot(c, w_ref[R_WF1:R_WF1 + H2, 0:HF],
                preferred_element_type=jnp.float32)
        + w_ref[R_BF1:R_BF1 + 1, 0:HF], 0.0)               # (ROWS, HF)
    out_ref[...] = (jnp.dot(h, w_ref[R_WF2:R_WF2 + HF, :],
                            preferred_element_type=jnp.float32)
                    + w_ref[R_BF2:R_BF2 + 1, :])           # (ROWS, A_PAD) full vreg


def pack_params(params):
    """One-time weight packing into a single lane-padded (SLAB_ROWS, 128) slab."""
    slab = jnp.zeros((SLAB_ROWS, A_PAD), jnp.float32)
    # conv1: taps flattened (k*C_IN + c) + bias row, zero rows up to KC1_PAD
    w1 = jnp.transpose(params["w_conv1"], (2, 1, 0)).reshape(K * C_IN, H1)
    slab = slab.at[R_W1:R_W1 + K * C_IN, :H1].set(w1)
    slab = slab.at[R_W1 + K * C_IN, :H1].set(params["b_conv1"])
    # conv2: tap k at rows R_W2 + k*H1, entry [i, o] = w_conv2[o, i, k]
    w2 = jnp.transpose(params["w_conv2"], (2, 1, 0)).reshape(K * H1, H2)
    slab = slab.at[R_W2:R_W2 + K * H1, :H2].set(w2)
    slab = slab.at[R_B2, :H2].set(params["b_conv2"])
    # decoder
    slab = slab.at[R_WF1:R_WF1 + H2, :HF].set(params["w_fc1"].T)
    slab = slab.at[R_BF1, :HF].set(params["b_fc1"])
    slab = slab.at[R_WF2:R_WF2 + HF, :A].set(params["w_fc2"].T)
    slab = slab.at[R_BF2, :A].set(params["b_fc2"])
    return slab


@jax.jit
def seq2seq_forward(x_ncw, slab):
    """x_ncw: (B, C_IN, L) float32 (PyTorch NCW).  slab: packed weights.  -> (B, A)."""
    x_blc = jnp.transpose(x_ncw, (0, 2, 1)).astype(jnp.float32)        # (B, L, C_IN)

    # conv1 im2col + ones column (bias) + zero pad to KC1_PAD, rows pre-split
    # into even/odd pooled positions so the in-kernel maxpool is a max of two
    # contiguous halves; row order = half*B*P1 + b*P1 + p.
    cols = jnp.concatenate([x_blc[:, k:k + L1, :] for k in range(K)], axis=-1)
    cols = jnp.concatenate(
        [cols,
         jnp.ones((B, L1, 1), jnp.float32),
         jnp.zeros((B, L1, KC1_PAD - KC1), jnp.float32)], axis=-1)     # (B, L1, 16)
    x1 = jnp.concatenate([cols[:, 0::2, :], cols[:, 1::2, :]], axis=0)
    x1 = x1.reshape(2 * ROWS, KC1_PAD)                                 # (16, 16)

    vmem = pl.BlockSpec(memory_space=pltpu.MemorySpace.VMEM)
    out_pad = pl.pallas_call(
        seq2seq_kernel,
        out_shape=jax.ShapeDtypeStruct((ROWS, A_PAD), jnp.float32),
        in_specs=[vmem, vmem],     # x1 im2col, packed weight slab (2 DMAs total)
        out_specs=vmem,
    )(x1, slab)

    # valid decoder rows live at r = b*P1; valid lanes are the first A.
    return out_pad[0:ROWS:P1, :A]


def ref_forward(x_ncw, params):
    """Pure-JAX reference mirroring the PyTorch NCW semantics."""
    x = x_ncw.astype(jnp.float32)

    def conv1d(x, w, b):   # x (B,C,Lin), w (O,C,K), b (O,)
        lout = x.shape[-1] - w.shape[-1] + 1
        y = sum(jnp.einsum("bcl,oc->bol", x[:, :, k:k + lout], w[:, :, k])
                for k in range(w.shape[-1]))
        return y + b[None, :, None]

    def maxpool(x):        # kernel 2, stride 2
        lp = x.shape[-1] // 2
        return jnp.maximum(x[:, :, 0:2 * lp:2], x[:, :, 1:2 * lp:2])

    y = jax.nn.relu(conv1d(x, params["w_conv1"], params["b_conv1"]))
    y = maxpool(y)
    y = jax.nn.relu(conv1d(y, params["w_conv2"], params["b_conv2"]))
    y = maxpool(y)                       # (B, H2, 1)
    c = jnp.squeeze(y, axis=-1)          # == torch .squeeze() for B > 1
    h = jax.nn.relu(c @ params["w_fc1"].T + params["b_fc1"])
    return h @ params["w_fc2"].T + params["b_fc2"]


def init_params(key):
    ks = jax.random.split(key, 8)
    s = 0.1
    return {
        "w_conv1": s * jax.random.normal(ks[0], (H1, C_IN, K), jnp.float32),
        "b_conv1": s * jax.random.normal(ks[1], (H1,), jnp.float32),
        "w_conv2": s * jax.random.normal(ks[2], (H2, H1, K), jnp.float32),
        "b_conv2": s * jax.random.normal(ks[3], (H2,), jnp.float32),
        "w_fc1":   s * jax.random.normal(ks[4], (HF, H2), jnp.float32),
        "b_fc1":   s * jax.random.normal(ks[5], (HF,), jnp.float32),
        "w_fc2":   s * jax.random.normal(ks[6], (A, HF), jnp.float32),
        "b_fc2":   s * jax.random.normal(ks[7], (A,), jnp.float32),
    }


if __name__ == "__main__":
    key = jax.random.PRNGKey(0)
    k_x, k_p = jax.random.split(key)
    x = jax.random.normal(k_x, (B, C_IN, L), jnp.float32)   # PyTorch NCW input
    params = init_params(k_p)

    # Weight packing is hoisted out of the per-call path (done once).
    slab = jax.block_until_ready(pack_params(params))

    out = seq2seq_forward(x, slab)
    out = jax.block_until_ready(out)

    ref = ref_forward(x, params)
    assert out.shape == (B, A), out.shape
    assert jnp.allclose(out, ref, atol=1e-4, rtol=1e-4), (out, ref)
    print("KERNEL_OK")
</pallas_src>

<mosaic_0001>
module attributes {stable_mosaic.version = 11 : i64} {
  func.func @seq2seq_kernel(%arg0: memref<16x16xf32, #tpu.memory_space<vmem>>, %arg1: memref<232x128xf32, #tpu.memory_space<vmem>>, %arg2: memref<8x128xf32, #tpu.memory_space<vmem>>) attributes {dimension_semantics = [], scalar_prefetch = 0 : i64, scratch_operands = 0 : i64, tpu.core_type = #tpu.core_type<tc>} {
    %c0 = arith.constant 0 : index
    %c0_0 = arith.constant 0 : index
    %0 = vector.load %arg1[%c0, %c0_0] : memref<232x128xf32, #tpu.memory_space<vmem>>, vector<16x32xf32>
    %c0_1 = arith.constant 0 : index
    %c0_2 = arith.constant 0 : index
    %1 = vector.load %arg0[%c0_1, %c0_2] : memref<16x16xf32, #tpu.memory_space<vmem>>, vector<16x16xf32>
    %cst = arith.constant dense<0.000000e+00> : vector<16x32xf32>
    %2 = tpu.matmul %1, %0, %cst {dimension_numbers = #tpu.dot_dimension_numbers<[1], [0], [0], [1], [0, 0, 1, 1], [], []>} : vector<16x16xf32>, vector<16x32xf32>, vector<16x32xf32> -> vector<16x32xf32>
    %cst_3 = arith.constant 0.000000e+00 : f32
    %3 = vector.broadcast %cst_3 : f32 to vector<16x32xf32>
    %4 = arith.maximumf %2, %3 : vector<16x32xf32>
    %5 = vector.extract_strided_slice %4 {offsets = [0, 0], sizes = [8, 32], strides = [1, 1]} : vector<16x32xf32> to vector<8x32xf32>
    %6 = vector.extract_strided_slice %4 {offsets = [8, 0], sizes = [8, 32], strides = [1, 1]} : vector<16x32xf32> to vector<8x32xf32>
    %7 = arith.maximumf %5, %6 : vector<8x32xf32>
    %c16 = arith.constant 16 : index
    %c0_4 = arith.constant 0 : index
    %8 = vector.load %arg1[%c16, %c0_4] : memref<232x128xf32, #tpu.memory_space<vmem>>, vector<32x64xf32>
    %cst_5 = arith.constant dense<0.000000e+00> : vector<8x64xf32>
    %9 = tpu.matmul %7, %8, %cst_5 {dimension_numbers = #tpu.dot_dimension_numbers<[1], [0], [0], [1], [0, 0, 1, 1], [], []>} : vector<8x32xf32>, vector<32x64xf32>, vector<8x64xf32> -> vector<8x64xf32>
    %c7_i32 = arith.constant 7 : i32
    %10 = tpu.dynamic_rotate %7 by %c7_i32 dim 0 : vector<8x32xf32>, i32 -> vector<8x32xf32>
    %c48 = arith.constant 48 : index
    %c0_6 = arith.constant 0 : index
    %11 = vector.load %arg1[%c48, %c0_6] : memref<232x128xf32, #tpu.memory_space<vmem>>, vector<32x64xf32>
    %cst_7 = arith.constant dense<0.000000e+00> : vector<8x64xf32>
    %12 = tpu.matmul %10, %11, %cst_7 {dimension_numbers = #tpu.dot_dimension_numbers<[1], [0], [0], [1], [0, 0, 1, 1], [], []>} : vector<8x32xf32>, vector<32x64xf32>, vector<8x64xf32> -> vector<8x64xf32>
    %13 = arith.addf %9, %12 : vector<8x64xf32>
    %c6_i32 = arith.constant 6 : i32
    %14 = tpu.dynamic_rotate %7 by %c6_i32 dim 0 : vector<8x32xf32>, i32 -> vector<8x32xf32>
    %c80 = arith.constant 80 : index
    %c0_8 = arith.constant 0 : index
    %15 = vector.load %arg1[%c80, %c0_8] : memref<232x128xf32, #tpu.memory_space<vmem>>, vector<32x64xf32>
    %cst_9 = arith.constant dense<0.000000e+00> : vector<8x64xf32>
    %16 = tpu.matmul %14, %15, %cst_9 {dimension_numbers = #tpu.dot_dimension_numbers<[1], [0], [0], [1], [0, 0, 1, 1], [], []>} : vector<8x32xf32>, vector<32x64xf32>, vector<8x64xf32> -> vector<8x64xf32>
    %17 = arith.addf %13, %16 : vector<8x64xf32>
    %c112 = arith.constant 112 : index
    %c0_10 = arith.constant 0 : index
    %18 = vector.load %arg1[%c112, %c0_10] : memref<232x128xf32, #tpu.memory_space<vmem>>, vector<1x64xf32>
    %19 = vector.broadcast %18 : vector<1x64xf32> to vector<8x64xf32>
    %20 = arith.addf %17, %19 : vector<8x64xf32>
    %cst_11 = arith.constant 0.000000e+00 : f32
    %21 = vector.broadcast %cst_11 : f32 to vector<8x64xf32>
    %22 = arith.maximumf %20, %21 : vector<8x64xf32>
    %c7_i32_12 = arith.constant 7 : i32
    %23 = tpu.dynamic_rotate %22 by %c7_i32_12 dim 0 : vector<8x64xf32>, i32 -> vector<8x64xf32>
    %24 = arith.maximumf %22, %23 : vector<8x64xf32>
    %c120 = arith.constant 120 : index
    %c0_13 = arith.constant 0 : index
    %25 = vector.load %arg1[%c120, %c0_13] : memref<232x128xf32, #tpu.memory_space<vmem>>, vector<64x32xf32>
    %cst_14 = arith.constant dense<0.000000e+00> : vector<8x32xf32>
    %26 = tpu.matmul %24, %25, %cst_14 {dimension_numbers = #tpu.dot_dimension_numbers<[1], [0], [0], [1], [0, 0, 1, 1], [], []>} : vector<8x64xf32>, vector<64x32xf32>, vector<8x32xf32> -> vector<8x32xf32>
    %c184 = arith.constant 184 : index
    %c0_15 = arith.constant 0 : index
    %27 = vector.load %arg1[%c184, %c0_15] : memref<232x128xf32, #tpu.memory_space<vmem>>, vector<1x32xf32>
    %28 = vector.broadcast %27 : vector<1x32xf32> to vector<8x32xf32>
    %29 = arith.addf %26, %28 : vector<8x32xf32>
    %cst_16 = arith.constant 0.000000e+00 : f32
    %30 = vector.broadcast %cst_16 : f32 to vector<8x32xf32>
    %31 = arith.maximumf %29, %30 : vector<8x32xf32>
    %c192 = arith.constant 192 : index
    %c0_17 = arith.constant 0 : index
    %32 = vector.load %arg1[%c192, %c0_17] : memref<232x128xf32, #tpu.memory_space<vmem>>, vector<32x128xf32>
    %cst_18 = arith.constant dense<0.000000e+00> : vector<8x128xf32>
    %33 = tpu.matmul %31, %32, %cst_18 {dimension_numbers = #tpu.dot_dimension_numbers<[1], [0], [0], [1], [0, 0, 1, 1], [], []>} : vector<8x32xf32>, vector<32x128xf32>, vector<8x128xf32> -> vector<8x128xf32>
    %c224 = arith.constant 224 : index
    %c0_19 = arith.constant 0 : index
    %34 = vector.load %arg1[%c224, %c0_19] : memref<232x128xf32, #tpu.memory_space<vmem>>, vector<1x128xf32>
    %35 = vector.broadcast %34 : vector<1x128xf32> to vector<8x128xf32>
    %36 = arith.addf %33, %35 : vector<8x128xf32>
    %c0_20 = arith.constant 0 : index
    %c0_21 = arith.constant 0 : index
    %37 = vector.load %arg2[%c0_20, %c0_21] : memref<8x128xf32, #tpu.memory_space<vmem>>, vector<8x128xf32>
    tpu.vector_store %arg2[%c0_20, %c0_21], %36 {strides = array<i32>} : memref<8x128xf32, #tpu.memory_space<vmem>>, vector<8x128xf32>,
    return
  }
}

</mosaic_0001>

<llo_original>
// kernel: seq2seq_forward.1
$region0: #{seq2seq_forward.1}
  #allocation0 [shape = 'u32[]', space=smem, size = 0x4, offset = 0x4, fixed_abs, tag = 'smem constant byte address 0x4 - core index']
  #allocation1 [shape = 'u32[144,128]{1,0:T(1,128)}', space=vmem, size = 0x12000, scoped, tag = 'internal scratch']
  %s0 = inlined_call_operand.vmem [shape: f32[16,16], index: 0, kind: input, shape index: {}]
  %s1 = inlined_call_operand.vmem [shape: f32[232,128], index: 1, kind: input, shape index: {}]
  %s2 = inlined_call_operand.vmem [shape: f32[8,128], index: 2, kind: output, shape index: {}]
  %s3 = sld [smem:[#allocation0]]
  $region18: #{seq2seq_forward.1} parent=0
    _
  %s5 = ssub.s32 1, %s3
  %s6 = scalar_select 0, %s5, %s3
  // Predicated region
  $region2: #{seq2seq_forward.1} parent=0 // pred_check
    _
  $region3: #{seq2seq_forward.1} parent=0 // pred_check_branch
    %8 = sbr.rel (0) target = $region5
  $region4: #{seq2seq_forward.1} parent=0 // pred_region
    _
  $region5: #{seq2seq_forward.1} parent=0 // pred_fallthru
    _
  // Predicated region
  $region6: #{seq2seq_forward.1} parent=0 // pred_check
    _
  $region7: #{seq2seq_forward.1} parent=0 // pred_check_branch
    %10 = sbr.rel (0) target = $region9
  $region8: #{seq2seq_forward.1} parent=0 // pred_region
    _
  $region9: #{seq2seq_forward.1} parent=0 // pred_fallthru
    _
  %v11 = vld [vmem:[%s1] sm:$0xff]
  %v12 = vld [vmem:[%s1 + $0x8] sm:$0xff]
  %v13 = vld [vmem:[%s0] sm:$0xff]
  %v14 = vld [vmem:[%s0 + $0x8] sm:$0xff]
  %vm15 = vcmask 130048
  %v17 = vsel %vm15, %v13, 0
  %v20 = vsel %vm15, %v14, 0
  %22 = vmatprep.subr.mxu0 0.0
  %23 = vmatpush1.msra.mxu0 %v11
  %24 = vmatprep.subr.mxu0 0.0
  %25 = vmatpush1.msra.mxu0 %v12
  %26 = vmatprep.subr.mxu0 0.0
  %27 = vmatpush1.msra.mxu0 0.0
  %28 = vmatprep.subr.mxu0 0.0
  %29 = vmatpush1.msra.mxu0 0.0
  %30 = vmatprep.subr.mxu0 0.0
  %31 = vmatpush1.msra.mxu0 0.0
  %32 = vmatprep.subr.mxu0 0.0
  %33 = vmatpush1.msra.mxu0 0.0
  %34 = vmatprep.subr.mxu0 0.0
  %35 = vmatpush1.msra.mxu0 0.0
  %36 = vmatprep.subr.mxu0 0.0
  %37 = vmatpush1.msra.mxu0 0.0
  %38 = vmatprep.subr.mxu0 0.0
  %39 = vmatpush1.msra.mxu0 0.0
  %40 = vmatprep.subr.mxu0 0.0
  %41 = vmatpush1.msra.mxu0 0.0
  %42 = vmatprep.subr.mxu0 0.0
  %43 = vmatpush1.msra.mxu0 0.0
  %44 = vmatprep.subr.mxu0 0.0
  %45 = vmatpush1.msra.mxu0 0.0
  %46 = vmatprep.subr.mxu0 0.0
  %47 = vmatpush1.msra.mxu0 0.0
  %48 = vmatprep.subr.mxu0 0.0
  %49 = vmatpush1.msra.mxu0 0.0
  %50 = vmatprep.subr.mxu0 0.0
  %51 = vmatpush1.msra.mxu0 0.0
  %52 = vmatprep.subr.mxu0 0.0
  %53 = vmatpush1.msra.mxu0 0.0
  %54 = vmatprep.subr.mxu0 0.0
  %55 = vmatpush1.msra.mxu0 0.0
  %56 = vmatprep.subr.mxu0 0.0
  %57 = vmatpush1.msra.mxu0 0.0
  %58 = vmatprep.subr.mxu0 0.0
  %59 = vmatpush1.msra.mxu0 0.0
  %60 = vmatprep.subr.mxu0 0.0
  %61 = vmatpush1.msra.mxu0 0.0
  %62 = vmatprep.subr.mxu0 0.0
  %63 = vmatpush1.msra.mxu0 0.0
  %64 = vmatprep.subr.mxu0 0.0
  %65 = vmatpush1.msra.mxu0 0.0
  %66 = vmatprep.subr.mxu0 0.0
  %67 = vmatpush1.msra.mxu0 0.0
  %68 = vmatprep.subr.mxu0 0.0
  %69 = vmatpush1.msra.mxu0 0.0
  %70 = vmatprep.subr.mxu0 0.0
  %71 = vmatpush1.msra.mxu0 0.0
  %72 = vmatprep.subr.mxu0 0.0
  %73 = vmatpush1.msra.mxu0 0.0
  %74 = vmatprep.subr.mxu0 0.0
  %75 = vmatpush1.msra.mxu0 0.0
  %76 = vmatprep.subr.mxu0 0.0
  %77 = vmatpush1.msra.mxu0 0.0
  %78 = vmatprep.subr.mxu0 0.0
  %79 = vmatpush1.msra.mxu0 0.0
  %80 = vmatprep.subr.mxu0 0.0
  %81 = vmatpush1.msra.mxu0 0.0
  %82 = vmatprep.subr.mxu0 0.0
  %83 = vmatpush1.msra.mxu0 0.0
  %84 = vmatprep.subr.mxu0 0.0
  %85 = vmatpush1.msra.mxu0 0.0
  %86 = vmatprep.mubr.f32.mxu0 0.0
  %87 = vmatmul.mubr.f32.gmra.mrb[0].mxu0 %v17
  %v88 = vpop.f32.mrb[0].mxu0
  %v89 = vadd.f32 0.0, %v88
  %v90 = vpop.f32.mrb[0].mxu0
  %91 = vmatprep.mubr.f32.mxu0 0.0
  %92 = vmatmul.mubr.f32.gmra.mrb[0].mxu0 %v20
  %v93 = vpop.f32.mrb[0].mxu0
  %v94 = vadd.f32 0.0, %v93
  %v95 = vpop.f32.mrb[0].mxu0
  %96 = vdwg.mxu0
  %v97 = vmax.f32 %v89, 0.0
  %v98 = vmax.f32 %v94, 0.0
  %v99 = vmax.f32 %v97, %v98
  %v100 = vld [vmem:[%s1 + $0x10] sm:$0xff]
  %v101 = vld [vmem:[%s1 + $0x18] sm:$0xff]
  %v102 = vld [vmem:[%s1 + $0x20] sm:$0xff]
  %v103 = vld [vmem:[%s1 + $0x28] sm:$0xff]
  %v104 = vrot.slane %v99, 1
  %v105 = vld [vmem:[%s1 + $0x30] sm:$0xff]
  %v106 = vld [vmem:[%s1 + $0x38] sm:$0xff]
  %v107 = vld [vmem:[%s1 + $0x40] sm:$0xff]
  %v108 = vld [vmem:[%s1 + $0x48] sm:$0xff]
  %vm109 = vcmask 261120
  %v111 = vsel %vm109, %v104, 0
  %113 = vmatprep.subr.mxu0 0.0
  %114 = vmatpush1.msra.mxu0 %v105
  %115 = vmatprep.subr.mxu0 0.0
  %116 = vmatpush1.msra.mxu0 %v106
  %117 = vmatprep.subr.mxu0 0.0
  %118 = vmatpush1.msra.mxu0 %v107
  %119 = vmatprep.subr.mxu0 0.0
  %120 = vmatpush1.msra.mxu0 %v108
  %121 = vmatprep.subr.mxu0 0.0
  %122 = vmatpush1.msra.mxu0 0.0
  %123 = vmatprep.subr.mxu0 0.0
  %124 = vmatpush1.msra.mxu0 0.0
  %125 = vmatprep.subr.mxu0 0.0
  %126 = vmatpush1.msra.mxu0 0.0
  %127 = vmatprep.subr.mxu0 0.0
  %128 = vmatpush1.msra.mxu0 0.0
  %129 = vmatprep.subr.mxu0 0.0
  %130 = vmatpush1.msra.mxu0 0.0
  %131 = vmatprep.subr.mxu0 0.0
  %132 = vmatpush1.msra.mxu0 0.0
  %133 = vmatprep.subr.mxu0 0.0
  %134 = vmatpush1.msra.mxu0 0.0
  %135 = vmatprep.subr.mxu0 0.0
  %136 = vmatpush1.msra.mxu0 0.0
  %137 = vmatprep.subr.mxu0 0.0
  %138 = vmatpush1.msra.mxu0 0.0
  %139 = vmatprep.subr.mxu0 0.0
  %140 = vmatpush1.msra.mxu0 0.0
  %141 = vmatprep.subr.mxu0 0.0
  %142 = vmatpush1.msra.mxu0 0.0
  %143 = vmatprep.subr.mxu0 0.0
  %144 = vmatpush1.msra.mxu0 0.0
  %145 = vmatprep.subr.mxu0 0.0
  %146 = vmatpush1.msra.mxu0 0.0
  %147 = vmatprep.subr.mxu0 0.0
  %148 = vmatpush1.msra.mxu0 0.0
  %149 = vmatprep.subr.mxu0 0.0
  %150 = vmatpush1.msra.mxu0 0.0
  %151 = vmatprep.subr.mxu0 0.0
  %152 = vmatpush1.msra.mxu0 0.0
  %153 = vmatprep.subr.mxu0 0.0
  %154 = vmatpush1.msra.mxu0 0.0
  %155 = vmatprep.subr.mxu0 0.0
  %156 = vmatpush1.msra.mxu0 0.0
  %157 = vmatprep.subr.mxu0 0.0
  %158 = vmatpush1.msra.mxu0 0.0
  %159 = vmatprep.subr.mxu0 0.0
  %160 = vmatpush1.msra.mxu0 0.0
  %161 = vmatprep.subr.mxu0 0.0
  %162 = vmatpush1.msra.mxu0 0.0
  %163 = vmatprep.subr.mxu0 0.0
  %164 = vmatpush1.msra.mxu0 0.0
  %165 = vmatprep.subr.mxu0 0.0
  %166 = vmatpush1.msra.mxu0 0.0
  %167 = vmatprep.subr.mxu0 0.0
  %168 = vmatpush1.msra.mxu0 0.0
  %169 = vmatprep.subr.mxu0 0.0
  %170 = vmatpush1.msra.mxu0 0.0
  %171 = vmatprep.subr.mxu0 0.0
  %172 = vmatpush1.msra.mxu0 0.0
  %173 = vmatprep.subr.mxu0 0.0
  %174 = vmatpush1.msra.mxu0 0.0
  %175 = vmatprep.subr.mxu0 0.0
  %176 = vmatpush1.msra.mxu0 0.0
  %177 = vmatprep.mubr.f32.mxu0 0.0
  %178 = vmatmul.mubr.f32.gmra.mrb[0].mxu0 %v111
  %v179 = vpop.f32.mrb[0].mxu0
  %v180 = vadd.f32 0.0, %v179
  %v181 = vpop.f32.mrb[0].mxu0
  %182 = vdwg.mxu0
  %v184 = vsel %vm109, %v99, 0
  %186 = vmatprep.subr.mxu0 0.0
  %187 = vmatpush1.msra.mxu0 %v100
  %188 = vmatprep.subr.mxu0 0.0
  %189 = vmatpush1.msra.mxu0 %v101
  %190 = vmatprep.subr.mxu0 0.0
  %191 = vmatpush1.msra.mxu0 %v102
  %192 = vmatprep.subr.mxu0 0.0
  %193 = vmatpush1.msra.mxu0 %v103
  %194 = vmatprep.subr.mxu0 0.0
  %195 = vmatpush1.msra.mxu0 0.0
  %196 = vmatprep.subr.mxu0 0.0
  %197 = vmatpush1.msra.mxu0 0.0
  %198 = vmatprep.subr.mxu0 0.0
  %199 = vmatpush1.msra.mxu0 0.0
  %200 = vmatprep.subr.mxu0 0.0
  %201 = vmatpush1.msra.mxu0 0.0
  %202 = vmatprep.subr.mxu0 0.0
  %203 = vmatpush1.msra.mxu0 0.0
  %204 = vmatprep.subr.mxu0 0.0
  %205 = vmatpush1.msra.mxu0 0.0
  %206 = vmatprep.subr.mxu0 0.0
  %207 = vmatpush1.msra.mxu0 0.0
  %208 = vmatprep.subr.mxu0 0.0
  %209 = vmatpush1.msra.mxu0 0.0
  %210 = vmatprep.subr.mxu0 0.0
  %211 = vmatpush1.msra.mxu0 0.0
  %212 = vmatprep.subr.mxu0 0.0
  %213 = vmatpush1.msra.mxu0 0.0
  %214 = vmatprep.subr.mxu0 0.0
  %215 = vmatpush1.msra.mxu0 0.0
  %216 = vmatprep.subr.mxu0 0.0
  %217 = vmatpush1.msra.mxu0 0.0
  %218 = vmatprep.subr.mxu0 0.0
  %219 = vmatpush1.msra.mxu0 0.0
  %220 = vmatprep.subr.mxu0 0.0
  %221 = vmatpush1.msra.mxu0 0.0
  %222 = vmatprep.subr.mxu0 0.0
  %223 = vmatpush1.msra.mxu0 0.0
  %224 = vmatprep.subr.mxu0 0.0
  %225 = vmatpush1.msra.mxu0 0.0
  %226 = vmatprep.subr.mxu0 0.0
  %227 = vmatpush1.msra.mxu0 0.0
  %228 = vmatprep.subr.mxu0 0.0
  %229 = vmatpush1.msra.mxu0 0.0
  %230 = vmatprep.subr.mxu0 0.0
  %231 = vmatpush1.msra.mxu0 0.0
  %232 = vmatprep.subr.mxu0 0.0
  %233 = vmatpush1.msra.mxu0 0.0
  %234 = vmatprep.subr.mxu0 0.0
  %235 = vmatpush1.msra.mxu0 0.0
  %236 = vmatprep.subr.mxu0 0.0
  %237 = vmatpush1.msra.mxu0 0.0
  %238 = vmatprep.subr.mxu0 0.0
  %239 = vmatpush1.msra.mxu0 0.0
  %240 = vmatprep.subr.mxu0 0.0
  %241 = vmatpush1.msra.mxu0 0.0
  %242 = vmatprep.subr.mxu0 0.0
  %243 = vmatpush1.msra.mxu0 0.0
  %244 = vmatprep.subr.mxu0 0.0
  %245 = vmatpush1.msra.mxu0 0.0
  %246 = vmatprep.subr.mxu0 0.0
  %247 = vmatpush1.msra.mxu0 0.0
  %248 = vmatprep.subr.mxu0 0.0
  %249 = vmatpush1.msra.mxu0 0.0
  %250 = vmatprep.mubr.f32.mxu0 0.0
  %251 = vmatmul.mubr.f32.gmra.mrb[0].mxu0 %v184
  %v252 = vpop.f32.mrb[0].mxu0
  %v253 = vadd.f32 %v180, %v252
  %v254 = vpop.f32.mrb[0].mxu0
  %255 = vdwg.mxu0
  %v256 = vrot.slane %v99, 2
  %v257 = vld [vmem:[%s1 + $0x50] sm:$0xff]
  %v258 = vld [vmem:[%s1 + $0x58] sm:$0xff]
  %v259 = vld [vmem:[%s1 + $0x60] sm:$0xff]
  %v260 = vld [vmem:[%s1 + $0x68] sm:$0xff]
  %v262 = vsel %vm109, %v256, 0
  %264 = vmatprep.subr.mxu0 0.0
  %265 = vmatpush1.msra.mxu0 %v257
  %266 = vmatprep.subr.mxu0 0.0
  %267 = vmatpush1.msra.mxu0 %v258
  %268 = vmatprep.subr.mxu0 0.0
  %269 = vmatpush1.msra.mxu0 %v259
  %270 = vmatprep.subr.mxu0 0.0
  %271 = vmatpush1.msra.mxu0 %v260
  %272 = vmatprep.subr.mxu0 0.0
  %273 = vmatpush1.msra.mxu0 0.0
  %274 = vmatprep.subr.mxu0 0.0
  %275 = vmatpush1.msra.mxu0 0.0
  %276 = vmatprep.subr.mxu0 0.0
  %277 = vmatpush1.msra.mxu0 0.0
  %278 = vmatprep.subr.mxu0 0.0
  %279 = vmatpush1.msra.mxu0 0.0
  %280 = vmatprep.subr.mxu0 0.0
  %281 = vmatpush1.msra.mxu0 0.0
  %282 = vmatprep.subr.mxu0 0.0
  %283 = vmatpush1.msra.mxu0 0.0
  %284 = vmatprep.subr.mxu0 0.0
  %285 = vmatpush1.msra.mxu0 0.0
  %286 = vmatprep.subr.mxu0 0.0
  %287 = vmatpush1.msra.mxu0 0.0
  %288 = vmatprep.subr.mxu0 0.0
  %289 = vmatpush1.msra.mxu0 0.0
  %290 = vmatprep.subr.mxu0 0.0
  %291 = vmatpush1.msra.mxu0 0.0
  %292 = vmatprep.subr.mxu0 0.0
  %293 = vmatpush1.msra.mxu0 0.0
  %294 = vmatprep.subr.mxu0 0.0
  %295 = vmatpush1.msra.mxu0 0.0
  %296 = vmatprep.subr.mxu0 0.0
  %297 = vmatpush1.msra.mxu0 0.0
  %298 = vmatprep.subr.mxu0 0.0
  %299 = vmatpush1.msra.mxu0 0.0
  %300 = vmatprep.subr.mxu0 0.0
  %301 = vmatpush1.msra.mxu0 0.0
  %302 = vmatprep.subr.mxu0 0.0
  %303 = vmatpush1.msra.mxu0 0.0
  %304 = vmatprep.subr.mxu0 0.0
  %305 = vmatpush1.msra.mxu0 0.0
  %306 = vmatprep.subr.mxu0 0.0
  %307 = vmatpush1.msra.mxu0 0.0
  %308 = vmatprep.subr.mxu0 0.0
  %309 = vmatpush1.msra.mxu0 0.0
  %310 = vmatprep.subr.mxu0 0.0
  %311 = vmatpush1.msra.mxu0 0.0
  %312 = vmatprep.subr.mxu0 0.0
  %313 = vmatpush1.msra.mxu0 0.0
  %314 = vmatprep.subr.mxu0 0.0
  %315 = vmatpush1.msra.mxu0 0.0
  %316 = vmatprep.subr.mxu0 0.0
  %317 = vmatpush1.msra.mxu0 0.0
  %318 = vmatprep.subr.mxu0 0.0
  %319 = vmatpush1.msra.mxu0 0.0
  %320 = vmatprep.subr.mxu0 0.0
  %321 = vmatpush1.msra.mxu0 0.0
  %322 = vmatprep.subr.mxu0 0.0
  %323 = vmatpush1.msra.mxu0 0.0
  %324 = vmatprep.subr.mxu0 0.0
  %325 = vmatpush1.msra.mxu0 0.0
  %326 = vmatprep.subr.mxu0 0.0
  %327 = vmatpush1.msra.mxu0 0.0
  %328 = vmatprep.mubr.f32.mxu0 0.0
  %329 = vmatmul.mubr.f32.gmra.mrb[0].mxu0 %v262
  %v330 = vpop.f32.mrb[0].mxu0
  %v331 = vadd.f32 0.0, %v330
  %v332 = vpop.f32.mrb[0].mxu0
  %333 = vdwg.mxu0
  %v334 = vadd.f32 %v253, %v331
  %v335 = vld [vmem:[%s1 + $0x70] sm:$0x1]
  %v336 = vlaneseq
  %v337 = vshrl.u32 %v336, 7
  %v338 = vsub.s32 0, %v337
  %v339 = vrot.slane %v335, %v338
  %v340 = vadd.f32 %v334, %v339
  %v341 = vmax.f32 %v340, 0.0
  %v342 = vrot.slane %v341, 1
  %v343 = vmax.f32 %v341, %v342
  %v344 = vld [vmem:[%s1 + $0x78] sm:$0xff]
  %v345 = vld [vmem:[%s1 + $0x80] sm:$0xff]
  %v346 = vld [vmem:[%s1 + $0x88] sm:$0xff]
  %v347 = vld [vmem:[%s1 + $0x90] sm:$0xff]
  %v348 = vld [vmem:[%s1 + $0x98] sm:$0xff]
  %v349 = vld [vmem:[%s1 + $0xa0] sm:$0xff]
  %v350 = vld [vmem:[%s1 + $0xa8] sm:$0xff]
  %v351 = vld [vmem:[%s1 + $0xb0] sm:$0xff]
  %v352 = vld [vmem:[%s1 + $0xb8] sm:$0x1]
  %v353 = vlaneseq
  %v354 = vshrl.u32 %v353, 7
  %v355 = vsub.s32 0, %v354
  %v356 = vrot.slane %v352, %v355
  %vm357 = vcmask 523264
  %v359 = vsel %vm357, %v343, 0
  %361 = vmatprep.subr.mxu0 0.0
  %362 = vmatpush1.msra.mxu0 %v344
  %363 = vmatprep.subr.mxu0 0.0
  %364 = vmatpush1.msra.mxu0 %v345
  %365 = vmatprep.subr.mxu0 0.0
  %366 = vmatpush1.msra.mxu0 %v346
  %367 = vmatprep.subr.mxu0 0.0
  %368 = vmatpush1.msra.mxu0 %v347
  %369 = vmatprep.subr.mxu0 0.0
  %370 = vmatpush1.msra.mxu0 %v348
  %371 = vmatprep.subr.mxu0 0.0
  %372 = vmatpush1.msra.mxu0 %v349
  %373 = vmatprep.subr.mxu0 0.0
  %374 = vmatpush1.msra.mxu0 %v350
  %375 = vmatprep.subr.mxu0 0.0
  %376 = vmatpush1.msra.mxu0 %v351
  %377 = vmatprep.subr.mxu0 0.0
  %378 = vmatpush1.msra.mxu0 0.0
  %379 = vmatprep.subr.mxu0 0.0
  %380 = vmatpush1.msra.mxu0 0.0
  %381 = vmatprep.subr.mxu0 0.0
  %382 = vmatpush1.msra.mxu0 0.0
  %383 = vmatprep.subr.mxu0 0.0
  %384 = vmatpush1.msra.mxu0 0.0
  %385 = vmatprep.subr.mxu0 0.0
  %386 = vmatpush1.msra.mxu0 0.0
  %387 = vmatprep.subr.mxu0 0.0
  %388 = vmatpush1.msra.mxu0 0.0
  %389 = vmatprep.subr.mxu0 0.0
  %390 = vmatpush1.msra.mxu0 0.0
  %391 = vmatprep.subr.mxu0 0.0
  %392 = vmatpush1.msra.mxu0 0.0
  %393 = vmatprep.subr.mxu0 0.0
  %394 = vmatpush1.msra.mxu0 0.0
  %395 = vmatprep.subr.mxu0 0.0
  %396 = vmatpush1.msra.mxu0 0.0
  %397 = vmatprep.subr.mxu0 0.0
  %398 = vmatpush1.msra.mxu0 0.0
  %399 = vmatprep.subr.mxu0 0.0
  %400 = vmatpush1.msra.mxu0 0.0
  %401 = vmatprep.subr.mxu0 0.0
  %402 = vmatpush1.msra.mxu0 0.0
  %403 = vmatprep.subr.mxu0 0.0
  %404 = vmatpush1.msra.mxu0 0.0
  %405 = vmatprep.subr.mxu0 0.0
  %406 = vmatpush1.msra.mxu0 0.0
  %407 = vmatprep.subr.mxu0 0.0
  %408 = vmatpush1.msra.mxu0 0.0
  %409 = vmatprep.subr.mxu0 0.0
  %410 = vmatpush1.msra.mxu0 0.0
  %411 = vmatprep.subr.mxu0 0.0
  %412 = vmatpush1.msra.mxu0 0.0
  %413 = vmatprep.subr.mxu0 0.0
  %414 = vmatpush1.msra.mxu0 0.0
  %415 = vmatprep.subr.mxu0 0.0
  %416 = vmatpush1.msra.mxu0 0.0
  %417 = vmatprep.subr.mxu0 0.0
  %418 = vmatpush1.msra.mxu0 0.0
  %419 = vmatprep.subr.mxu0 0.0
  %420 = vmatpush1.msra.mxu0 0.0
  %421 = vmatprep.subr.mxu0 0.0
  %422 = vmatpush1.msra.mxu0 0.0
  %423 = vmatprep.subr.mxu0 0.0
  %424 = vmatpush1.msra.mxu0 0.0
  %425 = vmatprep.mubr.f32.mxu0 0.0
  %426 = vmatmul.mubr.f32.gmra.mrb[0].mxu0 %v359
  %v427 = vpop.f32.mrb[0].mxu0
  %v428 = vadd.f32 %v356, %v427
  %v429 = vpop.f32.mrb[0].mxu0
  %430 = vdwg.mxu0
  %v431 = vmax.f32 %v428, 0.0
  %v432 = vld [vmem:[%s1 + $0xc0] sm:$0xff]
  %v433 = vld [vmem:[%s1 + $0xc8] sm:$0xff]
  %v434 = vld [vmem:[%s1 + $0xd0] sm:$0xff]
  %v435 = vld [vmem:[%s1 + $0xd8] sm:$0xff]
  %v436 = vld [vmem:[%s1 + $0xe0] sm:$0x1]
  %v437 = vlaneseq
  %v438 = vshrl.u32 %v437, 7
  %v439 = vsub.s32 0, %v438
  %v440 = vrot.slane %v436, %v439
  %v442 = vsel %vm109, %v431, 0
  %444 = vmatprep.subr.mxu0 0.0
  %445 = vmatpush1.msra.mxu0 %v432
  %446 = vmatprep.subr.mxu0 0.0
  %447 = vmatpush1.msra.mxu0 %v433
  %448 = vmatprep.subr.mxu0 0.0
  %449 = vmatpush1.msra.mxu0 %v434
  %450 = vmatprep.subr.mxu0 0.0
  %451 = vmatpush1.msra.mxu0 %v435
  %452 = vmatprep.subr.mxu0 0.0
  %453 = vmatpush1.msra.mxu0 0.0
  %454 = vmatprep.subr.mxu0 0.0
  %455 = vmatpush1.msra.mxu0 0.0
  %456 = vmatprep.subr.mxu0 0.0
  %457 = vmatpush1.msra.mxu0 0.0
  %458 = vmatprep.subr.mxu0 0.0
  %459 = vmatpush1.msra.mxu0 0.0
  %460 = vmatprep.subr.mxu0 0.0
  %461 = vmatpush1.msra.mxu0 0.0
  %462 = vmatprep.subr.mxu0 0.0
  %463 = vmatpush1.msra.mxu0 0.0
  %464 = vmatprep.subr.mxu0 0.0
  %465 = vmatpush1.msra.mxu0 0.0
  %466 = vmatprep.subr.mxu0 0.0
  %467 = vmatpush1.msra.mxu0 0.0
  %468 = vmatprep.subr.mxu0 0.0
  %469 = vmatpush1.msra.mxu0 0.0
  %470 = vmatprep.subr.mxu0 0.0
  %471 = vmatpush1.msra.mxu0 0.0
  %472 = vmatprep.subr.mxu0 0.0
  %473 = vmatpush1.msra.mxu0 0.0
  %474 = vmatprep.subr.mxu0 0.0
  %475 = vmatpush1.msra.mxu0 0.0
  %476 = vmatprep.subr.mxu0 0.0
  %477 = vmatpush1.msra.mxu0 0.0
  %478 = vmatprep.subr.mxu0 0.0
  %479 = vmatpush1.msra.mxu0 0.0
  %480 = vmatprep.subr.mxu0 0.0
  %481 = vmatpush1.msra.mxu0 0.0
  %482 = vmatprep.subr.mxu0 0.0
  %483 = vmatpush1.msra.mxu0 0.0
  %484 = vmatprep.subr.mxu0 0.0
  %485 = vmatpush1.msra.mxu0 0.0
  %486 = vmatprep.subr.mxu0 0.0
  %487 = vmatpush1.msra.mxu0 0.0
  %488 = vmatprep.subr.mxu0 0.0
  %489 = vmatpush1.msra.mxu0 0.0
  %490 = vmatprep.subr.mxu0 0.0
  %491 = vmatpush1.msra.mxu0 0.0
  %492 = vmatprep.subr.mxu0 0.0
  %493 = vmatpush1.msra.mxu0 0.0
  %494 = vmatprep.subr.mxu0 0.0
  %495 = vmatpush1.msra.mxu0 0.0
  %496 = vmatprep.subr.mxu0 0.0
  %497 = vmatpush1.msra.mxu0 0.0
  %498 = vmatprep.subr.mxu0 0.0
  %499 = vmatpush1.msra.mxu0 0.0
  %500 = vmatprep.subr.mxu0 0.0
  %501 = vmatpush1.msra.mxu0 0.0
  %502 = vmatprep.subr.mxu0 0.0
  %503 = vmatpush1.msra.mxu0 0.0
  %504 = vmatprep.subr.mxu0 0.0
  %505 = vmatpush1.msra.mxu0 0.0
  %506 = vmatprep.subr.mxu0 0.0
  %507 = vmatpush1.msra.mxu0 0.0
  %508 = vmatprep.mubr.f32.mxu0 0.0
  %509 = vmatmul.mubr.f32.gmra.mrb[0].mxu0 %v442
  %v510 = vpop.f32.mrb[0].mxu0
  %v511 = vadd.f32 %v440, %v510
  %v512 = vpop.f32.mrb[0].mxu0
  %513 = vdwg.mxu0
  %514 = vst [vmem:[%s2] sm:$0xff] %v511
  // Predicated region
  $region10: #{seq2seq_forward.1} parent=0 // pred_check
    _
  $region11: #{seq2seq_forward.1} parent=0 // pred_check_branch
    %516 = sbr.rel (0) target = $region13
  $region12: #{seq2seq_forward.1} parent=0 // pred_region
    _
  $region13: #{seq2seq_forward.1} parent=0 // pred_fallthru
    _
  // Predicated region
  $region14: #{seq2seq_forward.1} parent=0 // pred_check
    _
  $region15: #{seq2seq_forward.1} parent=0 // pred_check_branch
    %518 = sbr.rel (0) target = $region17
  $region16: #{seq2seq_forward.1} parent=0 // pred_region
    _
  $region17: #{seq2seq_forward.1} parent=0 // pred_fallthru
    _

</llo_original>
